<compile_context>
chip_gen: v5e
topology: v5e:2x2
jax: 0.10.0
libtpu: 0.0.40
codegen_flags: <defaults>
</compile_context>

<pallas_src>
import math

import jax
import jax.numpy as jnp
from jax.experimental import pallas as pl
from jax.experimental.pallas import tpu as pltpu


# ---------------------------------------------------------------------------
# In-kernel helpers
# ---------------------------------------------------------------------------
def _softmax_last(x):
    m = jnp.max(x, axis=-1, keepdims=True)
    e = jnp.exp(x - m)
    denom = jnp.sum(e, axis=-1, keepdims=True)
    # Exact reciprocal + multiply; goes to the EUP slot which has slack here.
    return e * pl.reciprocal(denom, approx=False)


def _gather_scores(sc_ref):
    # sc_ref: (n_s, Bb, s_blk) -> (Bb, S).  Static unroll + lane-dim concat
    # (avoids dynamic lane-offset stores and 3-D transposes).
    n_s = sc_ref.shape[0]
    if n_s == 1:
        return sc_ref[0]
    return jnp.concatenate([sc_ref[c] for c in range(n_s)], axis=-1)


# ---------------------------------------------------------------------------
# Kernels
# ---------------------------------------------------------------------------
def _dot_attn_kernel(hid_ref, enc_ref, out_ref, sc_ref):
    # hid: (Bb, H), enc: (s_blk, Bb, H) seq-major tile, out: (Bb, S) resident.
    j = pl.program_id(1)
    hid = hid_ref[...].astype(jnp.float32)
    enc = enc_ref[...].astype(jnp.float32)                 # f32 elementwise (v5e-safe)
    chunk = jnp.sum(hid[None, :, :] * enc, axis=2)         # (s_blk, Bb) lane reduce
    sc_ref[j] = chunk.T                                    # (Bb, s_blk)

    @pl.when(j == pl.num_programs(1) - 1)
    def _():
        out_ref[...] = _softmax_last(_gather_scores(sc_ref)).astype(out_ref.dtype)


def _general_attn_kernel(hid_ref, enc_ref, w_ref, b_ref, out_ref, sc_ref, hw_ref):
    # score[b,s] = (hid[b] @ W) . enc[s,b]  +  hid[b] . bias   (bias folded at the end)
    j = pl.program_id(1)
    hid = hid_ref[...]                                     # (Bb, H) f32

    @pl.when(j == 0)
    def _():
        hw_ref[...] = jnp.dot(hid.astype(w_ref.dtype), w_ref[...],
                              preferred_element_type=jnp.float32)   # (Bb, H), once per i

    enc = enc_ref[...].astype(jnp.float32)                 # (s_blk, Bb, H)
    chunk = jnp.sum(hw_ref[...][None, :, :] * enc, axis=2) # (s_blk, Bb)
    sc_ref[j] = chunk.T

    @pl.when(j == pl.num_programs(1) - 1)
    def _():
        bias_term = jnp.sum(hid.astype(jnp.float32) * b_ref[...], axis=1, keepdims=True)
        scores = _gather_scores(sc_ref) + bias_term        # (Bb, S)
        out_ref[...] = _softmax_last(scores).astype(out_ref.dtype)


def _concat_attn_kernel(hid_ref, enc_ref, w1T_ref, w2T_ref, b_ref, v_ref,
                        out_ref, sc_ref, hw_ref):
    # energy[s,b,:] = tanh(hid[b]@W1.T + enc[s,b]@W2.T + bias); score = v . energy
    # Chunk-fused: only O(s_blk*Bb*H) temporaries live per step.
    j = pl.program_id(1)
    s_blk, bb, H = enc_ref.shape

    @pl.when(j == 0)
    def _():
        hw_ref[...] = jnp.dot(hid_ref[...].astype(w1T_ref.dtype), w1T_ref[...],
                              preferred_element_type=jnp.float32)   # (Bb, H)

    enc2d = enc_ref[...].reshape(s_blk * bb, H)
    enc_part = jnp.dot(enc2d, w2T_ref[...], preferred_element_type=jnp.float32)
    energy = jnp.tanh(enc_part.reshape(s_blk, bb, H) + hw_ref[...][None, :, :] + b_ref[...])
    chunk = jnp.sum(v_ref[...] * energy, axis=2)           # (s_blk, Bb)
    sc_ref[j] = chunk.T

    @pl.when(j == pl.num_programs(1) - 1)
    def _():
        out_ref[...] = _softmax_last(_gather_scores(sc_ref)).astype(out_ref.dtype)


# ---------------------------------------------------------------------------
# Block / VMEM budgeting helpers
# ---------------------------------------------------------------------------
def _physical_vmem_bytes():
    try:
        info = pltpu.get_tpu_info()
        cap = getattr(info, "vmem_capacity_bytes", None)
        if cap:
            return int(cap)
    except Exception:
        pass
    return 64 * 1024 * 1024        # conservative (v7x-sized) fallback


def _vmem_limit_bytes():
    phys = _physical_vmem_bytes()
    # ~48 MiB on the 64 MiB part (v7x), ~96 MiB on the 128 MiB parts (v5e/v6e).
    return max(32 * 1024 * 1024, min(96 * 1024 * 1024, phys * 3 // 4))


def _pick_batch_block(B):
    cands = [c for c in (256, 128, 64, 32, 16, 8) if B % c == 0]
    multi = [c for c in cands if B // c >= 2]   # >=2 parallel steps -> both v7x TCs busy
    if multi:
        return multi[0]
    if cands:
        return cands[0]
    return B


def _pick_blocks(B, S, H, method, enc_itemsize, vmem_limit):
    b_blk = _pick_batch_block(B)
    # DMA granularity: seq-major reads issue strided rows of b_blk*H*itemsize
    # bytes; keep each row >= ~1 KiB or fall back to the full (contiguous) batch.
    if (b_blk != B and b_blk * H * enc_itemsize < 1024
            and B * H * enc_itemsize <= 2 * 1024 * 1024):
        b_blk = B

    budget = vmem_limit // 2   # headroom for residents / regalloc / double counting

    def fits(bb, sb, n_buf=2):
        enc = n_buf * sb * bb * H * enc_itemsize
        tmp = (2 * sb * bb * H * 4) if method == "concat" else 0   # enc_part + energy
        resident = 2 * H * H * 4 + 2 * bb * S * 4 + 2 * bb * H * 4
        return enc + tmp + resident <= budget

    while True:
        s_blk = None
        for cand in range(S, 0, -1):
            if S % cand == 0 and fits(b_blk, cand):
                s_blk = cand
                break
        if s_blk is not None:
            break
        nb = b_blk // 2
        if b_blk == B or nb < 8 or B % nb != 0:
            s_blk = 1          # best effort for pathological shapes
            break
        b_blk = nb

    n_s = S // s_blk
    triple_ok = fits(b_blk, s_blk, n_buf=3)
    return b_blk, s_blk, n_s, triple_ok


def _enc_spec(block_shape, index_map, n_seq_steps, allow_triple):
    # Deeper pipelining on the (DMA-bound) enc stream when it pays off and fits.
    if n_seq_steps >= 3 and allow_triple:
        try:
            return pl.BlockSpec(block_shape, index_map, pipeline_mode=pl.Buffered(3))
        except (TypeError, AttributeError):
            pass
    return pl.BlockSpec(block_shape, index_map)


def _cost_estimate(method, B, S, H):
    softmax_flops = 4 * B * S
    if method == "dot":
        flops = 2 * B * S * H + softmax_flops
        trans = B * S
        nbytes = 4 * (B * H + S * B * H + B * S)
    elif method == "general":
        flops = 2 * B * H * H + 2 * B * S * H + 2 * B * H + softmax_flops
        trans = B * S
        nbytes = 4 * (B * H + S * B * H + H * H + H + B * S)
    else:  # concat
        flops = 2 * B * H * H + 2 * B * S * H * H + 3 * B * S * H + softmax_flops
        trans = B * S * H + B * S
        nbytes = 4 * (B * H + S * B * H + 2 * H * H + 2 * H + B * S)
    return pl.CostEstimate(flops=flops, transcendentals=trans, bytes_accessed=nbytes)


# ---------------------------------------------------------------------------
# Wrapper (parameter setup + BlockSpec/grid plumbing + pallas_call)
# ---------------------------------------------------------------------------
class AttnPallas:
    def __init__(self, method, hidden_size, key, use_bf16=False):
        if method not in ("dot", "general", "concat"):
            raise ValueError(method, "is not an appropriate attention method.")
        self.method = method
        self.hidden_size = hidden_size
        self.use_bf16 = use_bf16

        # Deterministic parameter init (mirrors nn.Linear shapes).
        if method == "general":
            k1, k2 = jax.random.split(key, 2)
            bound = 1.0 / math.sqrt(hidden_size)
            self.W = jax.random.uniform(k1, (hidden_size, hidden_size),
                                        jnp.float32, -bound, bound)
            self.b = jax.random.uniform(k2, (hidden_size,), jnp.float32, -bound, bound)
        elif method == "concat":
            k1, k2, k3 = jax.random.split(key, 3)
            bound = 1.0 / math.sqrt(2 * hidden_size)
            self.W = jax.random.uniform(k1, (hidden_size, 2 * hidden_size),
                                        jnp.float32, -bound, bound)
            self.b = jax.random.uniform(k2, (hidden_size,), jnp.float32, -bound, bound)
            # nn.Parameter(torch.FloatTensor(H)) is uninitialized in PyTorch;
            # use a deterministic normal init here.
            self.v = jax.random.normal(k3, (hidden_size,), jnp.float32)

    def __call__(self, hidden, encoder_outputs):
        # hidden: (1, B, H)   encoder_outputs: (S, B, H)  (PyTorch seq-major; no
        # full transpose in the wrapper — the BlockSpec reads seq-major tiles).
        hid = hidden[0]                                   # (B, H)
        enc = encoder_outputs                             # (S, B, H)
        S, B, H = enc.shape

        enc_dtype = jnp.bfloat16 if self.use_bf16 else enc.dtype
        enc_in = enc.astype(enc_dtype)
        enc_itemsize = jnp.dtype(enc_dtype).itemsize

        vmem_limit = _vmem_limit_bytes()
        b_blk, s_blk, n_s, triple_ok = _pick_blocks(
            B, S, H, self.method, enc_itemsize, vmem_limit)
        grid = (B // b_blk, n_s)                          # batch parallel, seq arbitrary

        hid_spec = pl.BlockSpec((b_blk, H), lambda i, j: (i, 0))
        enc_spec = _enc_spec((s_blk, b_blk, H), lambda i, j: (j, i, 0), n_s, triple_ok)
        out_spec = pl.BlockSpec((b_blk, S), lambda i, j: (i, 0))   # resident over seq axis
        w_spec = pl.BlockSpec((H, H), lambda i, j: (0, 0))         # resident weights
        vec_spec = pl.BlockSpec((1, H), lambda i, j: (0, 0))

        out_shape = jax.ShapeDtypeStruct((B, S), jnp.float32)
        compiler_params = pltpu.CompilerParams(
            dimension_semantics=("parallel", "arbitrary"),
            vmem_limit_bytes=vmem_limit,
        )
        cost = _cost_estimate(self.method, B, S, H)

        sc_scratch = pltpu.VMEM((n_s, b_blk, s_blk), jnp.float32)   # per-chunk scores
        hw_scratch = pltpu.VMEM((b_blk, H), jnp.float32)            # cached hid @ W

        if self.method == "dot":
            out = pl.pallas_call(
                _dot_attn_kernel,
                grid=grid,
                in_specs=[hid_spec, enc_spec],
                out_specs=out_spec,
                out_shape=out_shape,
                scratch_shapes=[sc_scratch],
                compiler_params=compiler_params,
                cost_estimate=cost,
            )(hid, enc_in)
        elif self.method == "general":
            W_in = self.W.astype(jnp.bfloat16) if self.use_bf16 else self.W
            out = pl.pallas_call(
                _general_attn_kernel,
                grid=grid,
                in_specs=[hid_spec, enc_spec, w_spec, vec_spec],
                out_specs=out_spec,
                out_shape=out_shape,
                scratch_shapes=[sc_scratch, hw_scratch],
                compiler_params=compiler_params,
                cost_estimate=cost,
            )(hid, enc_in, W_in, self.b.reshape(1, H))
        else:  # concat
            w1T = self.W[:, :H].T      # (H, H) — multiplies the expanded hidden
            w2T = self.W[:, H:].T      # (H, H) — multiplies encoder outputs
            if self.use_bf16:
                w1T = w1T.astype(jnp.bfloat16)
                w2T = w2T.astype(jnp.bfloat16)
            out = pl.pallas_call(
                _concat_attn_kernel,
                grid=grid,
                in_specs=[hid_spec, enc_spec, w_spec, w_spec, vec_spec, vec_spec],
                out_specs=out_spec,
                out_shape=out_shape,
                scratch_shapes=[sc_scratch, hw_scratch],
                compiler_params=compiler_params,
                cost_estimate=cost,
            )(hid, enc_in, w1T, w2T, self.b.reshape(1, H), self.v.reshape(1, H))

        return out[:, None, :]        # (B, 1, S) — matches PyTorch output


# ---------------------------------------------------------------------------
# Pure-JAX reference (mirrors the PyTorch forward exactly)
# ---------------------------------------------------------------------------
def attn_reference(module, hidden, encoder_outputs):
    if module.method == "dot":
        energies = jnp.sum(hidden * encoder_outputs, axis=2)            # (S, B)
    elif module.method == "general":
        energy = encoder_outputs @ module.W.T + module.b                # (S, B, H)
        energies = jnp.sum(hidden * energy, axis=2)                     # (S, B)
    else:
        S = encoder_outputs.shape[0]
        hid_exp = jnp.broadcast_to(hidden, (S,) + hidden.shape[1:])
        cat = jnp.concatenate([hid_exp, encoder_outputs], axis=2)       # (S, B, 2H)
        energy = jnp.tanh(cat @ module.W.T + module.b)                  # (S, B, H)
        energies = jnp.sum(module.v * energy, axis=2)                   # (S, B)
    energies = energies.T                                               # (B, S)
    return jax.nn.softmax(energies, axis=1)[:, None, :]                 # (B, 1, S)


# ---------------------------------------------------------------------------
if __name__ == "__main__":
    B, S, H = 2, 8, 32
    key = jax.random.PRNGKey(0)
    k_hid, k_enc, k_dot, k_gen, k_cat = jax.random.split(key, 5)

    hidden = jax.random.normal(k_hid, (1, B, H), jnp.float32)           # (1, B, H)
    encoder_outputs = jax.random.normal(k_enc, (S, B, H), jnp.float32)  # (S, B, H)

    ok = True
    for method, k in (("dot", k_dot), ("general", k_gen), ("concat", k_cat)):
        mod = AttnPallas(method, H, k)
        out = jax.block_until_ready(mod(hidden, encoder_outputs))
        ref = attn_reference(mod, hidden, encoder_outputs)
        assert out.shape == (B, 1, S), (method, out.shape)
        if not jnp.allclose(out, ref, atol=1e-5, rtol=1e-5):
            ok = False
            print(f"MISMATCH for method={method}: max err "
                  f"{float(jnp.max(jnp.abs(out - ref)))}")
        # attention weights must sum to 1 over the seq axis
        assert jnp.allclose(jnp.sum(out, axis=-1), 1.0, atol=1e-5)

    if ok:
        print("KERNEL_OK")
</pallas_src>

<mosaic_0001>
module attributes {stable_mosaic.version = 11 : i64} {
  func.func @_dot_attn_kernel(%arg0: i32, %arg1: i32, %arg2: memref<2x32xf32, #tpu.memory_space<vmem>>, %arg3: memref<8x2x32xf32, #tpu.memory_space<vmem>>, %arg4: memref<2x8xf32, #tpu.memory_space<vmem>>, %arg5: memref<1x2x8xf32, #tpu.memory_space<vmem>>) attributes {dimension_semantics = [#tpu.dimension_semantics<parallel>, #tpu.dimension_semantics<arbitrary>], iteration_bounds = array<i64: 1, 1>, scalar_prefetch = 0 : i64, scratch_operands = 1 : i64, tpu.core_type = #tpu.core_type<tc>, window_params = [{transform_indices = @transform_0, window_bounds = array<i64: 2, 32>}, {transform_indices = @transform_1, window_bounds = array<i64: 8, 2, 32>}, {transform_indices = @transform_2, window_bounds = array<i64: 2, 8>}]} {
    %c0 = arith.constant 0 : index
    %c0_0 = arith.constant 0 : index
    %0 = vector.load %arg2[%c0, %c0_0] : memref<2x32xf32, #tpu.memory_space<vmem>>, vector<2x32xf32>
    %c0_1 = arith.constant 0 : index
    %c0_2 = arith.constant 0 : index
    %c0_3 = arith.constant 0 : index
    %1 = vector.load %arg3[%c0_1, %c0_2, %c0_3] : memref<8x2x32xf32, #tpu.memory_space<vmem>>, vector<8x2x32xf32>
    %2 = vector.shape_cast %0 : vector<2x32xf32> to vector<1x2x32xf32>
    %3 = vector.broadcast %2 : vector<1x2x32xf32> to vector<8x2x32xf32>
    %4 = arith.mulf %3, %1 : vector<8x2x32xf32>
    %cst = arith.constant dense<0.000000e+00> : vector<8x2xf32>
    %5 = vector.multi_reduction <add>, %4, %cst [2] : vector<8x2x32xf32> to vector<8x2xf32>
    %6 = tpu.transpose %5, [1, 0] : vector<8x2xf32> -> vector<2x8xf32>
    %7 = arith.index_cast %arg1 : i32 to index
    %c0_4 = arith.constant 0 : index
    %c0_5 = arith.constant 0 : index
    %8 = vector.load %arg5[%7, %c0_4, %c0_5] : memref<1x2x8xf32, #tpu.memory_space<vmem>>, vector<1x2x8xf32>
    %9 = vector.shape_cast %8 : vector<1x2x8xf32> to vector<2x8xf32>
    %10 = vector.shape_cast %6 : vector<2x8xf32> to vector<1x2x8xf32>
    tpu.vector_store %arg5[%7, %c0_4, %c0_5], %10 {strides = array<i32>} : memref<1x2x8xf32, #tpu.memory_space<vmem>>, vector<1x2x8xf32>,
    %c0_i32 = arith.constant 0 : i32
    %11 = arith.cmpi eq, %arg1, %c0_i32 : i32
    %12 = arith.extui %11 : i1 to i32
    %c0_i32_6 = arith.constant 0 : i32
    %13 = arith.cmpi ne, %12, %c0_i32_6 : i32
    scf.if %13 {
      %c0_7 = arith.constant 0 : index
      %c0_8 = arith.constant 0 : index
      %c0_9 = arith.constant 0 : index
      %14 = vector.load %arg5[%c0_7, %c0_8, %c0_9] : memref<1x2x8xf32, #tpu.memory_space<vmem>>, vector<1x2x8xf32>
      %15 = vector.shape_cast %14 : vector<1x2x8xf32> to vector<2x8xf32>
      %cst_10 = arith.constant dense<0xFF800000> : vector<2xf32>
      %16 = vector.multi_reduction <maximumf>, %15, %cst_10 [1] : vector<2x8xf32> to vector<2xf32>
      %17 = vector.shape_cast %16 : vector<2xf32> to vector<2x1xf32>
      %18 = vector.broadcast %17 : vector<2x1xf32> to vector<2x8xf32>
      %19 = arith.subf %15, %18 : vector<2x8xf32>
      %20 = math.exp %19 : vector<2x8xf32>
      %cst_11 = arith.constant dense<0.000000e+00> : vector<2xf32>
      %21 = vector.multi_reduction <add>, %20, %cst_11 [1] : vector<2x8xf32> to vector<2xf32>
      %22 = vector.shape_cast %21 : vector<2xf32> to vector<2x1xf32>
      %23 = tpu.reciprocal %22 : vector<2x1xf32> -> vector<2x1xf32>
      %24 = vector.broadcast %23 : vector<2x1xf32> to vector<2x8xf32>
      %25 = arith.mulf %20, %24 : vector<2x8xf32>
      %c0_12 = arith.constant 0 : index
      %c0_13 = arith.constant 0 : index
      %26 = vector.load %arg4[%c0_12, %c0_13] : memref<2x8xf32, #tpu.memory_space<vmem>>, vector<2x8xf32>
      tpu.vector_store %arg4[%c0_12, %c0_13], %25 {strides = array<i32>} : memref<2x8xf32, #tpu.memory_space<vmem>>, vector<2x8xf32>,
    } else {
    }
    return
  }
  func.func @transform_0(%arg0: i32, %arg1: i32) -> (i32, i32) {
    %c0_i32 = arith.constant 0 : i32
    %c0_i32_0 = arith.constant 0 : i32
    return %arg0, %c0_i32 : i32, i32
  }
  func.func @transform_1(%arg0: i32, %arg1: i32) -> (i32, i32, i32) {
    %c0_i32 = arith.constant 0 : i32
    %c0_i32_0 = arith.constant 0 : i32
    return %arg1, %arg0, %c0_i32 : i32, i32, i32
  }
  func.func @transform_2(%arg0: i32, %arg1: i32) -> (i32, i32) {
    %c0_i32 = arith.constant 0 : i32
    %c0_i32_0 = arith.constant 0 : i32
    return %arg0, %c0_i32 : i32, i32
  }
}

</mosaic_0001>

<llo_original>
// kernel: tpu_custom_call.1
$region0: #{tpu_custom_call.1}
  #allocation0 [shape = 'u32[]', space=smem, size = 0x4, offset = 0x4, fixed_abs, tag = 'smem constant byte address 0x4 - core index']
  #allocation1 [shape = 'u32[72,128]{1,0:T(1,128)}', space=vmem, size = 0x9000, scoped, tag = 'internal scratch']
  #allocation2 [shape = 'f32[1,2,8]{2,1,0:T(2,128)}', space=vmem, size = 0x400, scoped, tag = 'scratch operand']
  %s0 = inlined_call_operand.hbm [shape: f32[2,32], index: 0, kind: input, shape index: {}]
  %s1 = inlined_call_operand.hbm [shape: f32[8,2,32], index: 1, kind: input, shape index: {}]
  %s2 = inlined_call_operand.hbm [shape: f32[2,8], index: 2, kind: output, shape index: {}]
  %s3 = sld [smem:[#allocation0]]
  $region30: #{tpu_custom_call.1} parent=0
    _
  %s5 = ssub.s32 1, %s3
  %s6 = scalar_select 0, %s5, %s3
  $region1: #{tpu_custom_call.1} parent=0
    #allocation3 [shape = 'u8[1024]{0}', space=vmem, size = 0x400, scoped, tag = 'input window, operand 0, single buffered']
    #allocation4 [shape = 's32[1]{0}', space=sflag, size = 0x4, scoped, tag = 'scoped memory for tpu_custom_call.1']
    #allocation5 [shape = 's32[1]{0}', space=sflag, size = 0x4, scoped, tag = 'scoped memory for tpu_custom_call.1']
    #allocation6 [shape = 'u8[8192]{0}', space=vmem, size = 0x2000, scoped, tag = 'input window, operand 1, single buffered']
    #allocation7 [shape = 's32[1]{0}', space=sflag, size = 0x4, scoped, tag = 'scoped memory for tpu_custom_call.1']
    #allocation8 [shape = 'u8[1024]{0}', space=vmem, size = 0x400, scoped, tag = 'output window, operand 0, single buffered']
    %7 = vsyncpa [#allocation4], 0
    %8 = vsyncpa [#allocation7], 0
    %9 = vsyncpa [#allocation5], 0
    // Predicated region
    $region2: #{tpu_custom_call.1} parent=1 // pred_check
      _
    $region3: #{tpu_custom_call.1} parent=1 // pred_check_branch
      %11 = sbr.rel (0) target = $region5
    $region4: #{tpu_custom_call.1} parent=1 // pred_region
      %13 = vsyncadd [#allocation4], 0
      %s15 = sshll.u32 %s0, 4
      %s16 = int_to_ptr.hbm [resolvable:$true] %s15
      %s17 = sshll.u32 [#allocation3], 4
      %s18 = int_to_ptr.vmem [resolvable:$true] %s17
      %20 = dma.hbm_to_vmem [thread:$0]  %s16, 32, %s18, [#allocation4]
    $region5: #{tpu_custom_call.1} parent=1 // pred_fallthru
      _
    // Predicated region
    $region6: #{tpu_custom_call.1} parent=1 // pred_check
      _
    $region7: #{tpu_custom_call.1} parent=1 // pred_check_branch
      %22 = sbr.rel (0) target = $region9
    $region8: #{tpu_custom_call.1} parent=1 // pred_region
      %24 = vsyncadd [#allocation7], 0
      %s25 = sshll.u32 %s1, 4
      %s26 = int_to_ptr.hbm [resolvable:$true] %s25
      %s27 = sshll.u32 [#allocation6], 4
      %s28 = int_to_ptr.vmem [resolvable:$true] %s27
      %33 = dma.hbm_to_vmem [thread:$0]  %s26, 256, %s28, [#allocation7], 32, 32, 2
    $region9: #{tpu_custom_call.1} parent=1 // pred_fallthru
      _
    // Predicated region
    $region10: #{tpu_custom_call.1} parent=1 // pred_check
      _
    $region11: #{tpu_custom_call.1} parent=1 // pred_check_branch
      %35 = sbr.rel (0) target = $region13
    $region12: #{tpu_custom_call.1} parent=1 // pred_region
      %37 = dma.done [#allocation4], 32
    $region13: #{tpu_custom_call.1} parent=1 // pred_fallthru
      _
    // Predicated region
    $region14: #{tpu_custom_call.1} parent=1 // pred_check
      _
    $region15: #{tpu_custom_call.1} parent=1 // pred_check_branch
      %39 = sbr.rel (0) target = $region17
    $region16: #{tpu_custom_call.1} parent=1 // pred_region
      %41 = dma.done [#allocation7], 256
    $region17: #{tpu_custom_call.1} parent=1 // pred_fallthru
      _
    %v42 = vld [vmem:[#allocation3] sm:$0x3]
    %v43 = vld [vmem:[#allocation6] sm:$0x3]
    %v44 = vld [vmem:[#allocation6 + $0x2] sm:$0x3]
    %v45 = vld [vmem:[#allocation6 + $0x4] sm:$0x3]
    %v46 = vld [vmem:[#allocation6 + $0x6] sm:$0x3]
    %v47 = vld [vmem:[#allocation6 + $0x8] sm:$0x3]
    %v48 = vld [vmem:[#allocation6 + $0xa] sm:$0x3]
    %v49 = vld [vmem:[#allocation6 + $0xc] sm:$0x3]
    %v50 = vld [vmem:[#allocation6 + $0xe] sm:$0x3]
    %v51 = vmul.f32 %v42, %v43
    %v52 = vmul.f32 %v42, %v44
    %v53 = vmul.f32 %v42, %v45
    %v54 = vmul.f32 %v42, %v46
    %v55 = vmul.f32 %v42, %v47
    %v56 = vmul.f32 %v42, %v48
    %v57 = vmul.f32 %v42, %v49
    %v58 = vmul.f32 %v42, %v50
    %vm59 = vcmask 254976
    %v60 = vsel %vm59, %v51, 0.0
    %61 = vadd.xlane.f32.xlu0 %v60
    %v62 = vpop.xlane.xlu0 %61
    %v63 = vsel %vm59, %v52, 0.0
    %64 = vadd.xlane.f32.xlu0 %v63
    %v65 = vpop.xlane.xlu0 %64
    %v66 = vsel %vm59, %v53, 0.0
    %67 = vadd.xlane.f32.xlu0 %v66
    %v68 = vpop.xlane.xlu0 %67
    %v69 = vsel %vm59, %v54, 0.0
    %70 = vadd.xlane.f32.xlu0 %v69
    %v71 = vpop.xlane.xlu0 %70
    %v72 = vsel %vm59, %v55, 0.0
    %73 = vadd.xlane.f32.xlu0 %v72
    %v74 = vpop.xlane.xlu0 %73
    %v75 = vsel %vm59, %v56, 0.0
    %76 = vadd.xlane.f32.xlu0 %v75
    %v77 = vpop.xlane.xlu0 %76
    %v78 = vsel %vm59, %v57, 0.0
    %79 = vadd.xlane.f32.xlu0 %v78
    %v80 = vpop.xlane.xlu0 %79
    %v81 = vsel %vm59, %v58, 0.0
    %82 = vadd.xlane.f32.xlu0 %v81
    %v83 = vpop.xlane.xlu0 %82
    %v92 = vlaneseq
    %v93 = vand.u32 %v92, 127
    %v94 = vperm.slane %v62, %v93
    %v95 = vperm.slane %v65, %v93
    %v96 = vperm.slane %v68, %v93
    %v97 = vperm.slane %v71, %v93
    %v98 = vperm.slane %v74, %v93
    %v99 = vperm.slane %v77, %v93
    %v100 = vperm.slane %v80, %v93
    %v101 = vperm.slane %v83, %v93
    %vm102 = vcmask 1041409
    %v103 = vsel %vm102, %v95, %v94
    %vm104 = vcmask 1042434
    %v105 = vsel %vm104, %v96, %v103
    %vm106 = vcmask 1043459
    %v107 = vsel %vm106, %v97, %v105
    %vm108 = vcmask 1044484
    %v109 = vsel %vm108, %v98, %v107
    %vm110 = vcmask 1045509
    %v111 = vsel %vm110, %v99, %v109
    %vm112 = vcmask 1046534
    %v113 = vsel %vm112, %v100, %v111
    %vm114 = vcmask 1047559
    %v115 = vsel %vm114, %v101, %v113
    %117 = vxpose.xlu0.b32.start [1/16] %v115, 128
    %118 = vxpose.xlu0.b32.cont [2/16] 0.0, 128
    %119 = vxpose.xlu0.b32.cont [3/16] 0.0, 128
    %120 = vxpose.xlu0.b32.cont [4/16] 0.0, 128
    %121 = vxpose.xlu0.b32.cont [5/16] 0.0, 128
    %122 = vxpose.xlu0.b32.cont [6/16] 0.0, 128
    %123 = vxpose.xlu0.b32.cont [7/16] 0.0, 128
    %124 = vxpose.xlu0.b32.cont [8/16] 0.0, 128
    %125 = vxpose.xlu0.b32.cont [9/16] 0.0, 128
    %126 = vxpose.xlu0.b32.cont [10/16] 0.0, 128
    %127 = vxpose.xlu0.b32.cont [11/16] 0.0, 128
    %128 = vxpose.xlu0.b32.cont [12/16] 0.0, 128
    %129 = vxpose.xlu0.b32.cont [13/16] 0.0, 128
    %130 = vxpose.xlu0.b32.cont [14/16] 0.0, 128
    %131 = vxpose.xlu0.b32.cont [15/16] 0.0, 128
    %132 = vxpose.xlu0.b32.end [16/16] 0.0, 128
    %v133 = vpop.trf.xlu0
    %v134 = vpop.trf.xlu0
    %v135 = vpop.trf.xlu0
    %v136 = vpop.trf.xlu0
    %v137 = vpop.trf.xlu0
    %v138 = vpop.trf.xlu0
    %v139 = vpop.trf.xlu0
    %v140 = vpop.trf.xlu0
    %v141 = vpop.trf.xlu0
    %v142 = vpop.trf.xlu0
    %v143 = vpop.trf.xlu0
    %v144 = vpop.trf.xlu0
    %v145 = vpop.trf.xlu0
    %v146 = vpop.trf.xlu0
    %v147 = vpop.trf.xlu0
    %v148 = vpop.trf.xlu0
    %s149 = smul.u32 0, 2
    %s150 = scalar_lea.vmem [#allocation2], %s149
    %vm151 = vcmask 58368
    %152 = vst.msk [vmem:[%s150] sm:$0x3] %vm151, %v133
    %p153 = scmp.eq.s32.totalorder 0, 0
    // Predicated region
    $region18: #{tpu_custom_call.1} parent=1 // pred_check
      %p154 = pneg %p153
    $region19: #{tpu_custom_call.1} parent=1 // pred_check_branch
      %156 = sbr.rel (%p154) target = $region21
    $region20: #{tpu_custom_call.1} parent=1 // pred_region
      %v157 = vld [vmem:[#allocation2] sm:$0x3]
      %v158 = vsel %vm151, %v157, -inf
      %159 = vmax.xlane.f32.xlu0 %v158
      %v160 = vpop.xlane.xlu0 %159
      %v161 = vsub.f32 %v157, %v160
      %v162 = vmul.f32 %v161, 1.442695
      %v163 = vpow.pop %v162
      %v164 = vsel %vm151, %v163, 0.0
      %165 = vadd.xlane.f32.xlu0 %v164
      %v166 = vpop.xlane.xlu0 %165
      %v167 = vrcp.pop %v166
      %v168 = vmul.f32 %v166, %v167
      %v169 = vsub.f32 1.0, %v168
      %v170 = vmul.f32 %v167, %v169
      %v171 = vadd.f32 %v167, %v170
      %vm172 = vweird.f32 %v166
      %vm173 = vweird.f32 %v167
      %vm174 = vmor %vm172, %vm173
      %v175 = vsel %vm174, %v167, %v171
      %v176 = vand.u32 2147483647, %v166
      %vm177 = vcmp.eq.f32.partialorder %v176, 8.507059e+37
      %v178 = vand.u32 %v166, 2147483648
      %v179 = vor.u32 1.1754944e-38, %v178
      %v180 = vsel %vm177, %v179, %v175
      %v181 = vmul.f32 %v163, %v180
      %182 = vst.msk [vmem:[#allocation8] sm:$0x3] %vm151, %v181
    $region21: #{tpu_custom_call.1} parent=1 // pred_fallthru
      _
    // Predicated region
    $region22: #{tpu_custom_call.1} parent=1 // pred_check
      _
    $region23: #{tpu_custom_call.1} parent=1 // pred_check_branch
      %184 = sbr.rel (0) target = $region25
    $region24: #{tpu_custom_call.1} parent=1 // pred_region
      %186 = vsyncadd [#allocation5], 0
      %s188 = sshll.u32 [#allocation8], 4
      %s189 = int_to_ptr.vmem [resolvable:$true] %s188
      %s190 = sshll.u32 %s2, 4
      %s191 = int_to_ptr.hbm [resolvable:$true] %s190
      %193 = dma.vmem_to_hbm [thread:$0]  %s189, 32, %s191, [#allocation5]
    $region25: #{tpu_custom_call.1} parent=1 // pred_fallthru
      _
    // Predicated region
    $region26: #{tpu_custom_call.1} parent=1 // pred_check
      _
    $region27: #{tpu_custom_call.1} parent=1 // pred_check_branch
      %195 = sbr.rel (0) target = $region29
    $region28: #{tpu_custom_call.1} parent=1 // pred_region
      %197 = dma.done [#allocation5], 32
    $region29: #{tpu_custom_call.1} parent=1 // pred_fallthru
      _
    %198 = vsyncpa [#allocation4], 1
    %199 = vsyncpa [#allocation7], 1
    %200 = vsyncpa [#allocation5], 1

</llo_original>
